<compile_context>
chip_gen: v6e
topology: v6e:2x2x1
jax: 0.10.0
libtpu: 0.0.40
codegen_flags: <defaults>
</compile_context>

<pallas_src>
import functools

import jax
import jax.numpy as jnp
from jax.experimental import pallas as pl
from jax.experimental.pallas import tpu as pltpu

STATE_DIM = 8
ACTION_DIM = 2
HIDDEN_DIM = 256
LN_EPS = 1e-5

# Packed f32 parameter slab ([SLAB_ROWS, HIDDEN_DIM]): biases and LayerNorm gamma/beta.
ROW_A_B1, ROW_C_B1, ROW_A_G1, ROW_A_BT1 = 0, 1, 2, 3
ROW_A_B2, ROW_A_G2, ROW_A_BT2, ROW_C_B2 = 4, 5, 6, 7
ROW_HEAD_B = 8                      # lanes 0,1 = actor_out bias, lane 2 = critic_out bias
SLAB_ROWS = 16                      # padded to a sublane multiple

OUT_COLS = 8                        # compact output: lanes 0:2 = action_mean, lane 2 = value


def _round_up(x, m):
    return ((x + m - 1) // m) * m


# --------------------------------- kernel ----------------------------------

def actor_critic_kernel(s_ref, w1_ref, aw2_ref, cw2_ref, hw_ref, slab_ref, out_ref):
    slab = slab_ref[...]                                  # [SLAB_ROWS, HIDDEN_DIM] f32

    def row(r):                                           # [1, HIDDEN_DIM] broadcast row
        return slab[r:r + 1, :]

    def ln(x, gamma, beta):
        # Two-pass biased variance (matches torch.nn.LayerNorm); all math in f32.
        mu = jnp.mean(x, axis=-1, keepdims=True)
        xc = x - mu
        var = jnp.mean(xc * xc, axis=-1, keepdims=True)
        return xc * jax.lax.rsqrt(var + LN_EPS) * gamma + beta

    # ---- fused first layer: one bf16 MXU pass over [8, 512], then lane-slice ----
    s = s_ref[...].astype(jnp.bfloat16)                                    # [tb, 8]
    h1 = jnp.dot(s, w1_ref[...], preferred_element_type=jnp.float32)       # [tb, 512] f32
    a = h1[:, :HIDDEN_DIM] + row(ROW_A_B1)                                 # actor pre-LN
    c = h1[:, HIDDEN_DIM:] + row(ROW_C_B1)                                 # critic pre-ReLU

    # ---- actor branch: LN -> ReLU -> Linear -> LN -> ReLU ----
    a = jnp.maximum(ln(a, row(ROW_A_G1), row(ROW_A_BT1)), 0.0)
    a = jnp.dot(a.astype(jnp.bfloat16), aw2_ref[...],
                preferred_element_type=jnp.float32) + row(ROW_A_B2)
    a = jnp.maximum(ln(a, row(ROW_A_G2), row(ROW_A_BT2)), 0.0)

    # ---- critic branch: ReLU -> Linear -> ReLU ----
    c = jnp.maximum(c, 0.0)
    c = jnp.dot(c.astype(jnp.bfloat16), cw2_ref[...],
                preferred_element_type=jnp.float32) + row(ROW_C_B2)
    c = jnp.maximum(c, 0.0)

    # ---- output heads: one extra MXU pass (MXU has slack), result already lane-placed ----
    # hw rows 0:256 carry actor_out columns (lanes 0,1); rows 256:512 carry the critic_out
    # column (lane 2); all other lanes are zero.
    hd = (jnp.dot(a.astype(jnp.bfloat16), hw_ref[:HIDDEN_DIM, :],
                  preferred_element_type=jnp.float32)
          + jnp.dot(c.astype(jnp.bfloat16), hw_ref[HIDDEN_DIM:, :],
                    preferred_element_type=jnp.float32))                   # [tb, OUT_COLS]
    hd = hd + slab[ROW_HEAD_B:ROW_HEAD_B + 1, :OUT_COLS]

    lane = jax.lax.broadcasted_iota(jnp.int32, hd.shape, 1)
    out_ref[...] = jnp.where(lane < ACTION_DIM, jnp.tanh(hd), hd).astype(out_ref.dtype)


# --------------------------------- wrapper ----------------------------------

def _choose_batch_tile(batch, block_b):
    """Pick (batch_tile, padded_batch).

    Guarantees >= 2 grid steps whenever the batch spans more than one minimal (8-row) tile,
    so the 'parallel' batch axis can shard across both TensorCores on v7x.
    """
    pb = _round_up(max(batch, 1), 8)
    if pb <= 8:
        return pb, pb
    n_tiles = max(2, pl.cdiv(pb, block_b))
    tb = _round_up(pl.cdiv(pb, n_tiles), 8)
    return tb, _round_up(pb, tb)


@functools.partial(jax.jit, static_argnames=("block_b",))
def actor_critic_forward(state, kernel_params, *, block_b=512):
    """state: [B, STATE_DIM] f32 -> (action_mean [B, ACTION_DIM], value [B, 1])."""
    w1_fused, a_w2, c_w2, head_w, slab = kernel_params
    batch = state.shape[0]

    tb, pb = _choose_batch_tile(batch, block_b)
    if pb != batch:
        state = jnp.pad(state, ((0, pb - batch), (0, 0)))
    grid = (pb // tb,)

    out = pl.pallas_call(
        actor_critic_kernel,
        out_shape=jax.ShapeDtypeStruct((pb, OUT_COLS), jnp.float32),
        grid_spec=pltpu.PrefetchScalarGridSpec(
            num_scalar_prefetch=0,
            grid=grid,
            in_specs=[
                pl.BlockSpec((tb, STATE_DIM), lambda i: (i, 0)),
                # weights: constant block index -> stay VMEM-resident across grid steps
                pl.BlockSpec((STATE_DIM, 2 * HIDDEN_DIM), lambda i: (0, 0)),
                pl.BlockSpec((HIDDEN_DIM, HIDDEN_DIM), lambda i: (0, 0)),
                pl.BlockSpec((HIDDEN_DIM, HIDDEN_DIM), lambda i: (0, 0)),
                pl.BlockSpec((2 * HIDDEN_DIM, OUT_COLS), lambda i: (0, 0)),
                pl.BlockSpec((SLAB_ROWS, HIDDEN_DIM), lambda i: (0, 0)),
            ],
            out_specs=pl.BlockSpec((tb, OUT_COLS), lambda i: (i, 0)),
        ),
        compiler_params=pltpu.CompilerParams(
            dimension_semantics=("parallel",),     # shards batch tiles across TCs on v7x
            # v5e's default scoped VMEM is 16 MiB; only raise when large tiles need headroom.
            vmem_limit_bytes=(48 * 1024 * 1024) if tb > 512 else None,
        ),
    )(state, w1_fused, a_w2, c_w2, head_w, slab)

    action_mean = out[:batch, 0:ACTION_DIM]
    value = out[:batch, ACTION_DIM:ACTION_DIM + 1]
    return action_mean, value


# ------------------------- parameter construction -------------------------

def _orthogonal(key, out_features, in_features, gain):
    """Deterministic orthogonal init matching torch.nn.init.orthogonal_ semantics."""
    rows, cols = out_features, in_features
    flat = jax.random.normal(key, (rows, cols), dtype=jnp.float32)
    if rows < cols:
        flat = flat.T
    q, r = jnp.linalg.qr(flat)
    d = jnp.sign(jnp.diag(r))
    q = q * d[None, :]
    if rows < cols:
        q = q.T
    return gain * q  # [out_features, in_features]


def init_natural_params(key):
    """'Natural' params: weights stored as [in, out], 1-D bias / LayerNorm params."""
    keys = jax.random.split(key, 6)
    g2 = 2.0 ** 0.5

    def lin(k, in_f, out_f, gain):
        w = _orthogonal(k, out_f, in_f, gain).T          # [in, out]
        b = jnp.zeros((out_f,), jnp.float32)
        return w, b

    a_w1, a_b1 = lin(keys[0], STATE_DIM, HIDDEN_DIM, g2)
    a_w2, a_b2 = lin(keys[1], HIDDEN_DIM, HIDDEN_DIM, g2)
    a_w3, a_b3 = lin(keys[2], HIDDEN_DIM, ACTION_DIM, 0.01)
    c_w1, c_b1 = lin(keys[3], STATE_DIM, HIDDEN_DIM, g2)
    c_w2, c_b2 = lin(keys[4], HIDDEN_DIM, HIDDEN_DIM, g2)
    c_w3, c_b3 = lin(keys[5], HIDDEN_DIM, 1, 1.0)

    return dict(
        a_w1=a_w1, a_b1=a_b1,
        a_g1=jnp.ones((HIDDEN_DIM,), jnp.float32), a_bt1=jnp.zeros((HIDDEN_DIM,), jnp.float32),
        a_w2=a_w2, a_b2=a_b2,
        a_g2=jnp.ones((HIDDEN_DIM,), jnp.float32), a_bt2=jnp.zeros((HIDDEN_DIM,), jnp.float32),
        a_w3=a_w3, a_b3=a_b3,
        c_w1=c_w1, c_b1=c_b1,
        c_w2=c_w2, c_b2=c_b2,
        c_w3=c_w3, c_b3=c_b3,
    )


def pack_params(p):
    """Pack natural params into the kernel's 5 inputs (bf16 weights, f32 bias/LN slab)."""
    w1_fused = jnp.concatenate([p["a_w1"], p["c_w1"]], axis=1).astype(jnp.bfloat16)  # [8, 512]

    slab = jnp.zeros((SLAB_ROWS, HIDDEN_DIM), jnp.float32)
    slab = slab.at[ROW_A_B1].set(p["a_b1"])
    slab = slab.at[ROW_C_B1].set(p["c_b1"])
    slab = slab.at[ROW_A_G1].set(p["a_g1"])
    slab = slab.at[ROW_A_BT1].set(p["a_bt1"])
    slab = slab.at[ROW_A_B2].set(p["a_b2"])
    slab = slab.at[ROW_A_G2].set(p["a_g2"])
    slab = slab.at[ROW_A_BT2].set(p["a_bt2"])
    slab = slab.at[ROW_C_B2].set(p["c_b2"])
    head_b = jnp.zeros((HIDDEN_DIM,), jnp.float32)
    head_b = head_b.at[0].set(p["a_b3"][0]).at[1].set(p["a_b3"][1]).at[2].set(p["c_b3"][0])
    slab = slab.at[ROW_HEAD_B].set(head_b)

    head_w = jnp.zeros((2 * HIDDEN_DIM, OUT_COLS), jnp.float32)
    head_w = head_w.at[:HIDDEN_DIM, 0:ACTION_DIM].set(p["a_w3"])              # actor lanes 0,1
    head_w = head_w.at[HIDDEN_DIM:, ACTION_DIM:ACTION_DIM + 1].set(p["c_w3"])  # critic lane 2
    head_w = head_w.astype(jnp.bfloat16)

    return (w1_fused,
            p["a_w2"].astype(jnp.bfloat16),
            p["c_w2"].astype(jnp.bfloat16),
            head_w,
            slab)


# ------------------------------- reference --------------------------------

def _reference_forward(state, p, matmul_dtype=jnp.float32):
    """Pure-JAX reference matching the PyTorch module.

    With matmul_dtype=bf16 it mirrors the kernel's mixed precision (bf16 MXU operands,
    f32 accumulation, f32 everywhere else) for a tight structural check.
    """

    def dot(x, w):
        return jnp.dot(x.astype(matmul_dtype), w.astype(matmul_dtype),
                       preferred_element_type=jnp.float32,
                       precision=jax.lax.Precision.HIGHEST)

    def ln(x, g, b, eps=LN_EPS):
        mu = jnp.mean(x, axis=-1, keepdims=True)
        xc = x - mu
        var = jnp.mean(xc * xc, axis=-1, keepdims=True)
        return xc * jax.lax.rsqrt(var + eps) * g + b

    x = dot(state, p["a_w1"]) + p["a_b1"]
    x = jnp.maximum(ln(x, p["a_g1"], p["a_bt1"]), 0.0)
    x = dot(x, p["a_w2"]) + p["a_b2"]
    x = jnp.maximum(ln(x, p["a_g2"], p["a_bt2"]), 0.0)
    action_mean = jnp.tanh(dot(x, p["a_w3"]) + p["a_b3"])

    v = jnp.maximum(dot(state, p["c_w1"]) + p["c_b1"], 0.0)
    v = jnp.maximum(dot(v, p["c_w2"]) + p["c_b2"], 0.0)
    value = dot(v, p["c_w3"]) + p["c_b3"]
    return action_mean, value


if __name__ == "__main__":
    key = jax.random.PRNGKey(0)
    k_state, k_params = jax.random.split(key)

    batch = 8
    state = jax.random.normal(k_state, (batch, STATE_DIM), dtype=jnp.float32)
    nat_params = init_natural_params(k_params)
    kernel_params = pack_params(nat_params)

    action_mean, value = actor_critic_forward(state, kernel_params)
    jax.block_until_ready((action_mean, value))

    assert action_mean.shape == (batch, ACTION_DIM)
    assert value.shape == (batch, 1)

    # Tight structural check vs. a reference using the same bf16 matmul operands.
    bf_mean, bf_value = _reference_forward(state, nat_params, matmul_dtype=jnp.bfloat16)
    assert jnp.allclose(action_mean, bf_mean, atol=1e-3, rtol=1e-3)
    assert jnp.allclose(value, bf_value, atol=1e-3, rtol=1e-3)

    # Accuracy check vs. full-f32 module semantics (loose: kernel uses bf16 MXU operands).
    ref_mean, ref_value = _reference_forward(state, nat_params, matmul_dtype=jnp.float32)
    assert jnp.allclose(action_mean, ref_mean, atol=1.5e-2)
    assert jnp.allclose(value, ref_value, atol=0.1, rtol=0.02)

    print("KERNEL_OK")
</pallas_src>

<mosaic_0001>
module attributes {stable_mosaic.version = 11 : i64} {
  func.func @actor_critic_kernel(%arg0: i32, %arg1: memref<8x8xf32, #tpu.memory_space<vmem>>, %arg2: memref<8x512xbf16, #tpu.memory_space<vmem>>, %arg3: memref<256x256xbf16, #tpu.memory_space<vmem>>, %arg4: memref<256x256xbf16, #tpu.memory_space<vmem>>, %arg5: memref<512x8xbf16, #tpu.memory_space<vmem>>, %arg6: memref<16x256xf32, #tpu.memory_space<vmem>>, %arg7: memref<8x8xf32, #tpu.memory_space<vmem>>) attributes {dimension_semantics = [#tpu.dimension_semantics<parallel>], iteration_bounds = array<i64: 1>, scalar_prefetch = 0 : i64, scratch_operands = 0 : i64, tpu.core_type = #tpu.core_type<tc>, window_params = [{transform_indices = @transform_0, window_bounds = array<i64: 8, 8>}, {pipeline_mode = #tpu.pipeline_mode<synchronous>, transform_indices = @transform_1, window_bounds = array<i64: 8, 512>}, {pipeline_mode = #tpu.pipeline_mode<synchronous>, transform_indices = @transform_2, window_bounds = array<i64: 256, 256>}, {pipeline_mode = #tpu.pipeline_mode<synchronous>, transform_indices = @transform_3, window_bounds = array<i64: 256, 256>}, {pipeline_mode = #tpu.pipeline_mode<synchronous>, transform_indices = @transform_4, window_bounds = array<i64: 512, 8>}, {pipeline_mode = #tpu.pipeline_mode<synchronous>, transform_indices = @transform_5, window_bounds = array<i64: 16, 256>}, {transform_indices = @transform_6, window_bounds = array<i64: 8, 8>}]} {
    %c0 = arith.constant 0 : index
    %c0_0 = arith.constant 0 : index
    %0 = vector.load %arg6[%c0, %c0_0] : memref<16x256xf32, #tpu.memory_space<vmem>>, vector<16x256xf32>
    %c0_1 = arith.constant 0 : index
    %c0_2 = arith.constant 0 : index
    %1 = vector.load %arg1[%c0_1, %c0_2] : memref<8x8xf32, #tpu.memory_space<vmem>>, vector<8x8xf32>
    %2 = arith.truncf %1 : vector<8x8xf32> to vector<8x8xbf16>
    %c0_3 = arith.constant 0 : index
    %c0_4 = arith.constant 0 : index
    %3 = vector.load %arg2[%c0_3, %c0_4] : memref<8x512xbf16, #tpu.memory_space<vmem>>, vector<8x512xbf16>
    %cst = arith.constant dense<0.000000e+00> : vector<8x512xf32>
    %4 = tpu.matmul %2, %3, %cst {dimension_numbers = #tpu.dot_dimension_numbers<[1], [0], [0], [1], [0, 0, 1, 1], [], []>} : vector<8x8xbf16>, vector<8x512xbf16>, vector<8x512xf32> -> vector<8x512xf32>
    %5 = vector.extract_strided_slice %4 {offsets = [0, 0], sizes = [8, 256], strides = [1, 1]} : vector<8x512xf32> to vector<8x256xf32>
    %6 = vector.extract_strided_slice %0 {offsets = [0, 0], sizes = [1, 256], strides = [1, 1]} : vector<16x256xf32> to vector<1x256xf32>
    %7 = vector.broadcast %6 : vector<1x256xf32> to vector<8x256xf32>
    %8 = arith.addf %5, %7 : vector<8x256xf32>
    %9 = vector.extract_strided_slice %4 {offsets = [0, 256], sizes = [8, 256], strides = [1, 1]} : vector<8x512xf32> to vector<8x256xf32>
    %10 = vector.extract_strided_slice %0 {offsets = [1, 0], sizes = [1, 256], strides = [1, 1]} : vector<16x256xf32> to vector<1x256xf32>
    %11 = vector.broadcast %10 : vector<1x256xf32> to vector<8x256xf32>
    %12 = arith.addf %9, %11 : vector<8x256xf32>
    %13 = vector.extract_strided_slice %0 {offsets = [2, 0], sizes = [1, 256], strides = [1, 1]} : vector<16x256xf32> to vector<1x256xf32>
    %14 = vector.extract_strided_slice %0 {offsets = [3, 0], sizes = [1, 256], strides = [1, 1]} : vector<16x256xf32> to vector<1x256xf32>
    %cst_5 = arith.constant dense<0.000000e+00> : vector<8xf32>
    %15 = vector.multi_reduction <add>, %8, %cst_5 [1] : vector<8x256xf32> to vector<8xf32>
    %16 = vector.shape_cast %15 : vector<8xf32> to vector<8x1xf32>
    %cst_6 = arith.constant 2.560000e+02 : f32
    %17 = vector.broadcast %cst_6 : f32 to vector<8x1xf32>
    %18 = arith.divf %16, %17 : vector<8x1xf32>
    %19 = vector.broadcast %18 : vector<8x1xf32> to vector<8x256xf32>
    %20 = arith.subf %8, %19 : vector<8x256xf32>
    %21 = arith.mulf %20, %20 : vector<8x256xf32>
    %cst_7 = arith.constant dense<0.000000e+00> : vector<8xf32>
    %22 = vector.multi_reduction <add>, %21, %cst_7 [1] : vector<8x256xf32> to vector<8xf32>
    %23 = vector.shape_cast %22 : vector<8xf32> to vector<8x1xf32>
    %cst_8 = arith.constant 2.560000e+02 : f32
    %24 = vector.broadcast %cst_8 : f32 to vector<8x1xf32>
    %25 = arith.divf %23, %24 : vector<8x1xf32>
    %cst_9 = arith.constant 9.99999974E-6 : f32
    %26 = vector.broadcast %cst_9 : f32 to vector<8x1xf32>
    %27 = arith.addf %25, %26 : vector<8x1xf32>
    %28 = math.rsqrt %27 : vector<8x1xf32>
    %29 = vector.broadcast %28 : vector<8x1xf32> to vector<8x256xf32>
    %30 = arith.mulf %20, %29 : vector<8x256xf32>
    %31 = vector.broadcast %13 : vector<1x256xf32> to vector<8x256xf32>
    %32 = arith.mulf %30, %31 : vector<8x256xf32>
    %33 = vector.broadcast %14 : vector<1x256xf32> to vector<8x256xf32>
    %34 = arith.addf %32, %33 : vector<8x256xf32>
    %cst_10 = arith.constant 0.000000e+00 : f32
    %35 = vector.broadcast %cst_10 : f32 to vector<8x256xf32>
    %36 = arith.maximumf %34, %35 : vector<8x256xf32>
    %37 = arith.truncf %36 : vector<8x256xf32> to vector<8x256xbf16>
    %c0_11 = arith.constant 0 : index
    %c0_12 = arith.constant 0 : index
    %38 = vector.load %arg3[%c0_11, %c0_12] : memref<256x256xbf16, #tpu.memory_space<vmem>>, vector<256x256xbf16>
    %cst_13 = arith.constant dense<0.000000e+00> : vector<8x256xf32>
    %39 = tpu.matmul %37, %38, %cst_13 {dimension_numbers = #tpu.dot_dimension_numbers<[1], [0], [0], [1], [0, 0, 1, 1], [], []>} : vector<8x256xbf16>, vector<256x256xbf16>, vector<8x256xf32> -> vector<8x256xf32>
    %40 = vector.extract_strided_slice %0 {offsets = [4, 0], sizes = [1, 256], strides = [1, 1]} : vector<16x256xf32> to vector<1x256xf32>
    %41 = vector.broadcast %40 : vector<1x256xf32> to vector<8x256xf32>
    %42 = arith.addf %39, %41 : vector<8x256xf32>
    %43 = vector.extract_strided_slice %0 {offsets = [5, 0], sizes = [1, 256], strides = [1, 1]} : vector<16x256xf32> to vector<1x256xf32>
    %44 = vector.extract_strided_slice %0 {offsets = [6, 0], sizes = [1, 256], strides = [1, 1]} : vector<16x256xf32> to vector<1x256xf32>
    %cst_14 = arith.constant dense<0.000000e+00> : vector<8xf32>
    %45 = vector.multi_reduction <add>, %42, %cst_14 [1] : vector<8x256xf32> to vector<8xf32>
    %46 = vector.shape_cast %45 : vector<8xf32> to vector<8x1xf32>
    %cst_15 = arith.constant 2.560000e+02 : f32
    %47 = vector.broadcast %cst_15 : f32 to vector<8x1xf32>
    %48 = arith.divf %46, %47 : vector<8x1xf32>
    %49 = vector.broadcast %48 : vector<8x1xf32> to vector<8x256xf32>
    %50 = arith.subf %42, %49 : vector<8x256xf32>
    %51 = arith.mulf %50, %50 : vector<8x256xf32>
    %cst_16 = arith.constant dense<0.000000e+00> : vector<8xf32>
    %52 = vector.multi_reduction <add>, %51, %cst_16 [1] : vector<8x256xf32> to vector<8xf32>
    %53 = vector.shape_cast %52 : vector<8xf32> to vector<8x1xf32>
    %cst_17 = arith.constant 2.560000e+02 : f32
    %54 = vector.broadcast %cst_17 : f32 to vector<8x1xf32>
    %55 = arith.divf %53, %54 : vector<8x1xf32>
    %cst_18 = arith.constant 9.99999974E-6 : f32
    %56 = vector.broadcast %cst_18 : f32 to vector<8x1xf32>
    %57 = arith.addf %55, %56 : vector<8x1xf32>
    %58 = math.rsqrt %57 : vector<8x1xf32>
    %59 = vector.broadcast %58 : vector<8x1xf32> to vector<8x256xf32>
    %60 = arith.mulf %50, %59 : vector<8x256xf32>
    %61 = vector.broadcast %43 : vector<1x256xf32> to vector<8x256xf32>
    %62 = arith.mulf %60, %61 : vector<8x256xf32>
    %63 = vector.broadcast %44 : vector<1x256xf32> to vector<8x256xf32>
    %64 = arith.addf %62, %63 : vector<8x256xf32>
    %cst_19 = arith.constant 0.000000e+00 : f32
    %65 = vector.broadcast %cst_19 : f32 to vector<8x256xf32>
    %66 = arith.maximumf %64, %65 : vector<8x256xf32>
    %cst_20 = arith.constant 0.000000e+00 : f32
    %67 = vector.broadcast %cst_20 : f32 to vector<8x256xf32>
    %68 = arith.maximumf %12, %67 : vector<8x256xf32>
    %69 = arith.truncf %68 : vector<8x256xf32> to vector<8x256xbf16>
    %c0_21 = arith.constant 0 : index
    %c0_22 = arith.constant 0 : index
    %70 = vector.load %arg4[%c0_21, %c0_22] : memref<256x256xbf16, #tpu.memory_space<vmem>>, vector<256x256xbf16>
    %cst_23 = arith.constant dense<0.000000e+00> : vector<8x256xf32>
    %71 = tpu.matmul %69, %70, %cst_23 {dimension_numbers = #tpu.dot_dimension_numbers<[1], [0], [0], [1], [0, 0, 1, 1], [], []>} : vector<8x256xbf16>, vector<256x256xbf16>, vector<8x256xf32> -> vector<8x256xf32>
    %72 = vector.extract_strided_slice %0 {offsets = [7, 0], sizes = [1, 256], strides = [1, 1]} : vector<16x256xf32> to vector<1x256xf32>
    %73 = vector.broadcast %72 : vector<1x256xf32> to vector<8x256xf32>
    %74 = arith.addf %71, %73 : vector<8x256xf32>
    %cst_24 = arith.constant 0.000000e+00 : f32
    %75 = vector.broadcast %cst_24 : f32 to vector<8x256xf32>
    %76 = arith.maximumf %74, %75 : vector<8x256xf32>
    %77 = arith.truncf %66 : vector<8x256xf32> to vector<8x256xbf16>
    %c0_25 = arith.constant 0 : index
    %c0_26 = arith.constant 0 : index
    %78 = vector.load %arg5[%c0_25, %c0_26] : memref<512x8xbf16, #tpu.memory_space<vmem>>, vector<256x8xbf16>
    %cst_27 = arith.constant dense<0.000000e+00> : vector<8x8xf32>
    %79 = tpu.matmul %77, %78, %cst_27 {dimension_numbers = #tpu.dot_dimension_numbers<[1], [0], [0], [1], [0, 0, 1, 1], [], []>} : vector<8x256xbf16>, vector<256x8xbf16>, vector<8x8xf32> -> vector<8x8xf32>
    %80 = arith.truncf %76 : vector<8x256xf32> to vector<8x256xbf16>
    %c256 = arith.constant 256 : index
    %c0_28 = arith.constant 0 : index
    %81 = vector.load %arg5[%c256, %c0_28] : memref<512x8xbf16, #tpu.memory_space<vmem>>, vector<256x8xbf16>
    %cst_29 = arith.constant dense<0.000000e+00> : vector<8x8xf32>
    %82 = tpu.matmul %80, %81, %cst_29 {dimension_numbers = #tpu.dot_dimension_numbers<[1], [0], [0], [1], [0, 0, 1, 1], [], []>} : vector<8x256xbf16>, vector<256x8xbf16>, vector<8x8xf32> -> vector<8x8xf32>
    %83 = arith.addf %79, %82 : vector<8x8xf32>
    %84 = vector.extract_strided_slice %0 {offsets = [8, 0], sizes = [1, 8], strides = [1, 1]} : vector<16x256xf32> to vector<1x8xf32>
    %85 = vector.broadcast %84 : vector<1x8xf32> to vector<8x8xf32>
    %86 = arith.addf %83, %85 : vector<8x8xf32>
    %87 = tpu.iota {dimensions = array<i32: 1>} : vector<8x8xi32>
    %c2_i32 = arith.constant 2 : i32
    %88 = vector.broadcast %c2_i32 : i32 to vector<8x8xi32>
    %89 = arith.cmpi slt, %87, %88 : vector<8x8xi32>
    %90 = math.tanh %86 : vector<8x8xf32>
    %91 = arith.select %89, %90, %86 : vector<8x8xi1>, vector<8x8xf32>
    %c0_30 = arith.constant 0 : index
    %c0_31 = arith.constant 0 : index
    %92 = vector.load %arg7[%c0_30, %c0_31] : memref<8x8xf32, #tpu.memory_space<vmem>>, vector<8x8xf32>
    tpu.vector_store %arg7[%c0_30, %c0_31], %91 {strides = array<i32>} : memref<8x8xf32, #tpu.memory_space<vmem>>, vector<8x8xf32>,
    return
  }
  func.func @transform_0(%arg0: i32) -> (i32, i32) {
    %c0_i32 = arith.constant 0 : i32
    %c0_i32_0 = arith.constant 0 : i32
    return %arg0, %c0_i32 : i32, i32
  }
  func.func @transform_1(%arg0: i32) -> (i32, i32) {
    %c0_i32 = arith.constant 0 : i32
    %c0_i32_0 = arith.constant 0 : i32
    %c0_i32_1 = arith.constant 0 : i32
    return %c0_i32, %c0_i32_0 : i32, i32
  }
  func.func @transform_2(%arg0: i32) -> (i32, i32) {
    %c0_i32 = arith.constant 0 : i32
    %c0_i32_0 = arith.constant 0 : i32
    %c0_i32_1 = arith.constant 0 : i32
    return %c0_i32, %c0_i32_0 : i32, i32
  }
  func.func @transform_3(%arg0: i32) -> (i32, i32) {
    %c0_i32 = arith.constant 0 : i32
    %c0_i32_0 = arith.constant 0 : i32
    %c0_i32_1 = arith.constant 0 : i32
    return %c0_i32, %c0_i32_0 : i32, i32
  }
  func.func @transform_4(%arg0: i32) -> (i32, i32) {
    %c0_i32 = arith.constant 0 : i32
    %c0_i32_0 = arith.constant 0 : i32
    %c0_i32_1 = arith.constant 0 : i32
    return %c0_i32, %c0_i32_0 : i32, i32
  }
  func.func @transform_5(%arg0: i32) -> (i32, i32) {
    %c0_i32 = arith.constant 0 : i32
    %c0_i32_0 = arith.constant 0 : i32
    %c0_i32_1 = arith.constant 0 : i32
    return %c0_i32, %c0_i32_0 : i32, i32
  }
  func.func @transform_6(%arg0: i32) -> (i32, i32) {
    %c0_i32 = arith.constant 0 : i32
    %c0_i32_0 = arith.constant 0 : i32
    return %arg0, %c0_i32 : i32, i32
  }
}

</mosaic_0001>

<llo_original>
// kernel: actor_critic_forward.1
$region0: #{actor_critic_forward.1}
  #allocation0 [shape = 'u32[]', space=smem, size = 0x4, offset = 0x4, fixed_abs, tag = 'smem constant byte address 0x4 - core index']
  #allocation1 [shape = 'u32[144,128]{1,0:T(1,128)}', space=vmem, size = 0x12000, scoped, tag = 'internal scratch']
  %s0 = inlined_call_operand.hbm [shape: f32[8,8], index: 0, kind: input, shape index: {}]
  %s1 = inlined_call_operand.vmem [shape: bf16[8,512], index: 1, kind: input, shape index: {}]
  %s2 = inlined_call_operand.vmem [shape: bf16[256,256], index: 2, kind: input, shape index: {}]
  %s3 = inlined_call_operand.hbm [shape: bf16[256,256], index: 3, kind: input, shape index: {}]
  %s4 = inlined_call_operand.vmem [shape: bf16[512,8], index: 4, kind: input, shape index: {}]
  %s5 = inlined_call_operand.hbm [shape: f32[16,256], index: 5, kind: input, shape index: {}]
  %s6 = inlined_call_operand.vmem [shape: f32[8,8], index: 6, kind: output, shape index: {}]
  %s7 = sld [smem:[#allocation0]]
  $region46: #{actor_critic_forward.1} parent=0
    _
  %s9 = ssub.s32 1, %s7
  %s10 = scalar_select 0, %s9, %s7
  $region1: #{actor_critic_forward.1} parent=0
    #allocation2 [shape = 'u8[4096]{0}', space=vmem, size = 0x1000, scoped, tag = 'input window, operand 0, single buffered']
    #allocation3 [shape = 's32[1]{0}', space=sflag, size = 0x4, scoped, tag = 'scoped memory for actor_critic_forward.1']
    #allocation4 [shape = 'u8[131072]{0}', space=vmem, size = 0x20000, scoped, tag = 'input window, operand 3, single buffered']
    #allocation5 [shape = 's32[1]{0}', space=sflag, size = 0x4, scoped, tag = 'scoped memory for actor_critic_forward.1']
    #allocation6 [shape = 'u8[16384]{0}', space=vmem, size = 0x4000, scoped, tag = 'input window, operand 5, single buffered']
    %11 = vsyncpa [#allocation3], 0
    %12 = vsyncpa [#allocation5], 0
    // Predicated region
    $region2: #{actor_critic_forward.1} parent=1 // pred_check
      _
    $region3: #{actor_critic_forward.1} parent=1 // pred_check_branch
      %14 = sbr.rel (0) target = $region5
    $region4: #{actor_critic_forward.1} parent=1 // pred_region
      %s16 = ssub.s32 128, 128
      %17 = vsyncadd [#allocation3], %s16
      %s19 = sshll.u32 [#allocation2], 4
      %s20 = int_to_ptr.vmem [resolvable:$true] %s19
      %22 = dma.hbm_to_vmem [thread:$0]  %s0, 128, %s20, [#allocation3]
    $region5: #{actor_critic_forward.1} parent=1 // pred_fallthru
      _
    // Predicated region
    $region6: #{actor_critic_forward.1} parent=1 // pred_check
      _
    $region7: #{actor_critic_forward.1} parent=1 // pred_check_branch
      %24 = sbr.rel (0) target = $region9
    $region8: #{actor_critic_forward.1} parent=1 // pred_region
      _
    $region9: #{actor_critic_forward.1} parent=1 // pred_fallthru
      _
    // Predicated region
    $region10: #{actor_critic_forward.1} parent=1 // pred_check
      _
    $region11: #{actor_critic_forward.1} parent=1 // pred_check_branch
      %26 = sbr.rel (0) target = $region13
    $region12: #{actor_critic_forward.1} parent=1 // pred_region
      _
    $region13: #{actor_critic_forward.1} parent=1 // pred_fallthru
      _
    // Predicated region
    $region14: #{actor_critic_forward.1} parent=1 // pred_check
      _
    $region15: #{actor_critic_forward.1} parent=1 // pred_check_branch
      %28 = sbr.rel (0) target = $region17
    $region16: #{actor_critic_forward.1} parent=1 // pred_region
      %s30 = ssub.s32 4096, 4096
      %31 = vsyncadd [#allocation5], %s30
      %s32 = sshll.u32 [#allocation4], 4
      %s33 = int_to_ptr.vmem [resolvable:$true] %s32
      %38 = dma.hbm_to_vmem [thread:$0]  %s3, 4096, %s33, [#allocation5], 128, 128, 8
    $region17: #{actor_critic_forward.1} parent=1 // pred_fallthru
      _
    // Predicated region
    $region18: #{actor_critic_forward.1} parent=1 // pred_check
      _
    $region19: #{actor_critic_forward.1} parent=1 // pred_check_branch
      %40 = sbr.rel (0) target = $region21
    $region20: #{actor_critic_forward.1} parent=1 // pred_region
      _
    $region21: #{actor_critic_forward.1} parent=1 // pred_fallthru
      _
    // Predicated region
    $region22: #{actor_critic_forward.1} parent=1 // pred_check
      _
    $region23: #{actor_critic_forward.1} parent=1 // pred_check_branch
      %42 = sbr.rel (0) target = $region25
    $region24: #{actor_critic_forward.1} parent=1 // pred_region
      %s44 = ssub.s32 512, 512
      %45 = vsyncadd [#allocation5], %s44
      %s46 = sshll.u32 [#allocation6], 4
      %s47 = int_to_ptr.vmem [resolvable:$true] %s46
      %52 = dma.hbm_to_vmem [thread:$0]  %s5, 512, %s47, [#allocation5], 256, 256, 16
    $region25: #{actor_critic_forward.1} parent=1 // pred_fallthru
      _
    // Predicated region
    $region26: #{actor_critic_forward.1} parent=1 // pred_check
      _
    $region27: #{actor_critic_forward.1} parent=1 // pred_check_branch
      %54 = sbr.rel (0) target = $region29
    $region28: #{actor_critic_forward.1} parent=1 // pred_region
      %55 = dma.done [#allocation3], 128
    $region29: #{actor_critic_forward.1} parent=1 // pred_fallthru
      _
    // Predicated region
    $region30: #{actor_critic_forward.1} parent=1 // pred_check
      _
    $region31: #{actor_critic_forward.1} parent=1 // pred_check_branch
      %57 = sbr.rel (0) target = $region33
    $region32: #{actor_critic_forward.1} parent=1 // pred_region
      %58 = dma.done [#allocation5], 4096
    $region33: #{actor_critic_forward.1} parent=1 // pred_fallthru
      _
    // Predicated region
    $region34: #{actor_critic_forward.1} parent=1 // pred_check
      _
    $region35: #{actor_critic_forward.1} parent=1 // pred_check_branch
      %60 = sbr.rel (0) target = $region37
    $region36: #{actor_critic_forward.1} parent=1 // pred_region
      %61 = dma.done [#allocation5], 512
    $region37: #{actor_critic_forward.1} parent=1 // pred_fallthru
      _
    %v63 = vld [vmem:[#allocation6] sm:$0xff]
    %v64 = vld [vmem:[#allocation6 + $0x8] sm:$0xff]
    %v65 = vld [vmem:[#allocation6 + $0x10] sm:$0xff]
    %v66 = vld [vmem:[#allocation2] sm:$0xff]
    %v67 = vpack.c.bf16 %v66, %v66
    %v68 = vld [vmem:[%s1] sm:$0xff]
    %v69 = vld [vmem:[%s1 + $0x8] sm:$0xff]
    %v72 = vunpack.c.l.b16 %v68
    %v73 = vunpack.c.h.b16 %v68
    %v74 = vunpack.c.l.b16 %v69
    %v75 = vunpack.c.h.b16 %v69
    %v76 = vpack.c.b16 %v72, %v72
    %v77 = vpack.c.b16 %v73, %v73
    %v78 = vpack.c.b16 %v74, %v74
    %v79 = vpack.c.b16 %v75, %v75
    %vm80 = vcmask 64512
    %v82 = vsel %vm80, %v67, 0
    %vm84 = vcmask 1043456
    %v86 = vsel %vm84, %v76, 0
    %v89 = vsel %vm84, %v77, 0
    %v92 = vsel %vm84, %v78, 0
    %v95 = vsel %vm84, %v79, 0
    %97 = vmatprep.subr.bf16.mxu0 0
    %98 = vmatpush1.bf16.msra.mxu0 0
    %99 = vmatprep.subr.bf16.mxu0 0
    %100 = vmatpush1.bf16.msra.mxu0 0
    %101 = vmatprep.subr.bf16.mxu0 0
    %102 = vmatpush1.bf16.msra.mxu0 0
    %103 = vmatprep.subr.bf16.mxu0 0
    %104 = vmatpush1.bf16.msra.mxu0 0
    %105 = vmatprep.subr.bf16.mxu0 0
    %106 = vmatpush1.bf16.msra.mxu0 0
    %107 = vmatprep.subr.bf16.mxu0 0
    %108 = vmatpush1.bf16.msra.mxu0 0
    %109 = vmatprep.subr.bf16.mxu0 0
    %110 = vmatpush1.bf16.msra.mxu0 0
    %111 = vmatprep.subr.bf16.mxu0 %v89
    %112 = vmatpush1.bf16.msra.mxu0 %v86
    %113 = vmatprep.subr.bf16.mxu0 0
    %114 = vmatpush2.bf16.msra.mxu0 0
    %115 = vmatprep.subr.bf16.mxu0 0
    %116 = vmatpush2.bf16.msra.mxu0 0
    %117 = vmatprep.subr.bf16.mxu0 0
    %118 = vmatpush2.bf16.msra.mxu0 0
    %119 = vmatprep.subr.bf16.mxu0 0
    %120 = vmatpush2.bf16.msra.mxu0 0
    %121 = vmatprep.subr.bf16.mxu0 0
    %122 = vmatpush2.bf16.msra.mxu0 0
    %123 = vmatprep.subr.bf16.mxu0 0
    %124 = vmatpush2.bf16.msra.mxu0 0
    %125 = vmatprep.subr.bf16.mxu0 0
    %126 = vmatpush2.bf16.msra.mxu0 0
    %127 = vmatprep.subr.bf16.mxu0 0
    %128 = vmatpush2.bf16.msra.mxu0 0
    %129 = vmatprep.mubr.bf16.mxu0 0
    %130 = vmatmul.mubr.bf16.gmra.mxu0 %v82
    %v131 = vpop.f32.mrf.mxu0
    %v132 = vadd.f32 0.0, %v131
    %v133 = vpop.f32.mrf.mxu0
    %v134 = vadd.f32 0.0, %v133
    %v135 = vpop.f32.mrf.mxu0
    %v136 = vpop.f32.mrf.mxu0
    %137 = vdwg.mxu0
    %138 = vmatprep.subr.bf16.mxu0 0
    %139 = vmatpush1.bf16.msra.mxu0 0
    %140 = vmatprep.subr.bf16.mxu0 0
    %141 = vmatpush1.bf16.msra.mxu0 0
    %142 = vmatprep.subr.bf16.mxu0 0
    %143 = vmatpush1.bf16.msra.mxu0 0
    %144 = vmatprep.subr.bf16.mxu0 0
    %145 = vmatpush1.bf16.msra.mxu0 0
    %146 = vmatprep.subr.bf16.mxu0 0
    %147 = vmatpush1.bf16.msra.mxu0 0
    %148 = vmatprep.subr.bf16.mxu0 0
    %149 = vmatpush1.bf16.msra.mxu0 0
    %150 = vmatprep.subr.bf16.mxu0 0
    %151 = vmatpush1.bf16.msra.mxu0 0
    %152 = vmatprep.subr.bf16.mxu0 %v95
    %153 = vmatpush1.bf16.msra.mxu0 %v92
    %154 = vmatprep.subr.bf16.mxu0 0
    %155 = vmatpush2.bf16.msra.mxu0 0
    %156 = vmatprep.subr.bf16.mxu0 0
    %157 = vmatpush2.bf16.msra.mxu0 0
    %158 = vmatprep.subr.bf16.mxu0 0
    %159 = vmatpush2.bf16.msra.mxu0 0
    %160 = vmatprep.subr.bf16.mxu0 0
    %161 = vmatpush2.bf16.msra.mxu0 0
    %162 = vmatprep.subr.bf16.mxu0 0
    %163 = vmatpush2.bf16.msra.mxu0 0
    %164 = vmatprep.subr.bf16.mxu0 0
    %165 = vmatpush2.bf16.msra.mxu0 0
    %166 = vmatprep.subr.bf16.mxu0 0
    %167 = vmatpush2.bf16.msra.mxu0 0
    %168 = vmatprep.subr.bf16.mxu0 0
    %169 = vmatpush2.bf16.msra.mxu0 0
    %170 = vmatprep.mubr.bf16.mxu0 0
    %171 = vmatmul.mubr.bf16.gmra.mxu0 %v82
    %v172 = vpop.f32.mrf.mxu0
    %v173 = vadd.f32 0.0, %v172
    %v174 = vpop.f32.mrf.mxu0
    %v175 = vadd.f32 0.0, %v174
    %v176 = vpop.f32.mrf.mxu0
    %v177 = vpop.f32.mrf.mxu0
    %178 = vdwg.mxu0
    %v179 = vlaneseq
    %v180 = vshrl.u32 %v179, 7
    %v181 = vsub.s32 0, %v180
    %v182 = vrot.slane %v63, %v181
    %v183 = vlaneseq
    %v184 = vshrl.u32 %v183, 7
    %v185 = vsub.s32 0, %v184
    %v186 = vrot.slane %v64, %v185
    %v187 = vadd.f32 %v132, %v182
    %v188 = vadd.f32 %v134, %v186
    %v189 = vlaneseq
    %v190 = vshrl.u32 %v189, 7
    %v191 = vsub.s32 1, %v190
    %v192 = vrot.slane %v63, %v191
    %v193 = vlaneseq
    %v194 = vshrl.u32 %v193, 7
    %v195 = vsub.s32 1, %v194
    %v196 = vrot.slane %v64, %v195
    %v197 = vadd.f32 %v173, %v192
    %v198 = vadd.f32 %v175, %v196
    %v199 = vadd.f32 %v187, %v188
    %200 = vadd.xlane.f32.xlu0 %v199
    %v201 = vpop.xlane.xlu0 %200
    %v202 = vrcp.pop 256.0
    %v203 = vmul.f32 %v201, %v202
    %v204 = vsub.f32 %v187, %v203
    %v205 = vsub.f32 %v188, %v203
    %v206 = vmul.f32 %v204, %v204
    %v207 = vmul.f32 %v205, %v205
    %v208 = vadd.f32 %v206, %v207
    %209 = vadd.xlane.f32.xlu0 %v208
    %v210 = vpop.xlane.xlu0 %209
    %v211 = vmul.f32 %v210, %v202
    %v212 = vadd.f32 %v211, 1e-05
    %v213 = vrsqrt.pop %v212
    %v214 = vmul.f32 %v204, %v213
    %v215 = vmul.f32 %v205, %v213
    %v216 = vlaneseq
    %v217 = vshrl.u32 %v216, 7
    %v218 = vsub.s32 2, %v217
    %v219 = vrot.slane %v63, %v218
    %v220 = vlaneseq
    %v221 = vshrl.u32 %v220, 7
    %v222 = vsub.s32 2, %v221
    %v223 = vrot.slane %v64, %v222
    %v224 = vmul.f32 %v214, %v219
    %v225 = vmul.f32 %v215, %v223
    %v226 = vlaneseq
    %v227 = vshrl.u32 %v226, 7
    %v228 = vsub.s32 3, %v227
    %v229 = vrot.slane %v63, %v228
    %v230 = vlaneseq
    %v231 = vshrl.u32 %v230, 7
    %v232 = vsub.s32 3, %v231
    %v233 = vrot.slane %v64, %v232
    %v234 = vadd.f32 %v224, %v229
    %v235 = vadd.f32 %v225, %v233
    %v236 = vmax.f32 %v234, 0.0
    %v237 = vmax.f32 %v235, 0.0
    %v238 = vpack.c.bf16 %v236, %v236
    %v239 = vpack.c.bf16 %v237, %v237
    %v240 = vld [vmem:[%s2] sm:$0xff]
    %v241 = vld [vmem:[%s2 + $0x8] sm:$0xff]
    %v242 = vld [vmem:[%s2 + $0x10] sm:$0xff]
    %v243 = vld [vmem:[%s2 + $0x18] sm:$0xff]
    %v244 = vld [vmem:[%s2 + $0x20] sm:$0xff]
    %v245 = vld [vmem:[%s2 + $0x28] sm:$0xff]
    %v246 = vld [vmem:[%s2 + $0x30] sm:$0xff]
    %v247 = vld [vmem:[%s2 + $0x38] sm:$0xff]
    %v248 = vld [vmem:[%s2 + $0x40] sm:$0xff]
    %v249 = vld [vmem:[%s2 + $0x48] sm:$0xff]
    %v250 = vld [vmem:[%s2 + $0x50] sm:$0xff]
    %v251 = vld [vmem:[%s2 + $0x58] sm:$0xff]
    %v252 = vld [vmem:[%s2 + $0x60] sm:$0xff]
    %v253 = vld [vmem:[%s2 + $0x68] sm:$0xff]
    %v254 = vld [vmem:[%s2 + $0x70] sm:$0xff]
    %v255 = vld [vmem:[%s2 + $0x78] sm:$0xff]
    %v256 = vld [vmem:[%s2 + $0x80] sm:$0xff]
    %v257 = vld [vmem:[%s2 + $0x88] sm:$0xff]
    %v258 = vld [vmem:[%s2 + $0x90] sm:$0xff]
    %v259 = vld [vmem:[%s2 + $0x98] sm:$0xff]
    %v260 = vld [vmem:[%s2 + $0xa0] sm:$0xff]
    %v261 = vld [vmem:[%s2 + $0xa8] sm:$0xff]
    %v262 = vld [vmem:[%s2 + $0xb0] sm:$0xff]
    %v263 = vld [vmem:[%s2 + $0xb8] sm:$0xff]
    %v264 = vld [vmem:[%s2 + $0xc0] sm:$0xff]
    %v265 = vld [vmem:[%s2 + $0xc8] sm:$0xff]
    %v266 = vld [vmem:[%s2 + $0xd0] sm:$0xff]
    %v267 = vld [vmem:[%s2 + $0xd8] sm:$0xff]
    %v268 = vld [vmem:[%s2 + $0xe0] sm:$0xff]
    %v269 = vld [vmem:[%s2 + $0xe8] sm:$0xff]
    %v270 = vld [vmem:[%s2 + $0xf0] sm:$0xff]
    %v271 = vld [vmem:[%s2 + $0xf8] sm:$0xff]
    %v272 = vlaneseq
    %v273 = vshrl.u32 %v272, 7
    %v274 = vsub.s32 4, %v273
    %v275 = vrot.slane %v63, %v274
    %v276 = vlaneseq
    %v277 = vshrl.u32 %v276, 7
    %v278 = vsub.s32 4, %v277
    %v279 = vrot.slane %v64, %v278
    %v312 = vunpack.c.l.b16 %v240
    %v313 = vunpack.c.h.b16 %v240
    %v314 = vunpack.c.l.b16 %v241
    %v315 = vunpack.c.h.b16 %v241
    %v316 = vunpack.c.l.b16 %v242
    %v317 = vunpack.c.h.b16 %v242
    %v318 = vunpack.c.l.b16 %v243
    %v319 = vunpack.c.h.b16 %v243
    %v320 = vunpack.c.l.b16 %v244
    %v321 = vunpack.c.h.b16 %v244
    %v322 = vunpack.c.l.b16 %v245
    %v323 = vunpack.c.h.b16 %v245
    %v324 = vunpack.c.l.b16 %v246
    %v325 = vunpack.c.h.b16 %v246
    %v326 = vunpack.c.l.b16 %v247
    %v327 = vunpack.c.h.b16 %v247
    %v328 = vunpack.c.l.b16 %v248
    %v329 = vunpack.c.h.b16 %v248
    %v330 = vunpack.c.l.b16 %v249
    %v331 = vunpack.c.h.b16 %v249
    %v332 = vunpack.c.l.b16 %v250
    %v333 = vunpack.c.h.b16 %v250
    %v334 = vunpack.c.l.b16 %v251
    %v335 = vunpack.c.h.b16 %v251
    %v336 = vunpack.c.l.b16 %v252
    %v337 = vunpack.c.h.b16 %v252
    %v338 = vunpack.c.l.b16 %v253
    %v339 = vunpack.c.h.b16 %v253
    %v340 = vunpack.c.l.b16 %v254
    %v341 = vunpack.c.h.b16 %v254
    %v342 = vunpack.c.l.b16 %v255
    %v343 = vunpack.c.h.b16 %v255
    %v344 = vunpack.c.l.b16 %v256
    %v345 = vunpack.c.h.b16 %v256
    %v346 = vunpack.c.l.b16 %v257
    %v347 = vunpack.c.h.b16 %v257
    %v348 = vunpack.c.l.b16 %v258
    %v349 = vunpack.c.h.b16 %v258
    %v350 = vunpack.c.l.b16 %v259
    %v351 = vunpack.c.h.b16 %v259
    %v352 = vunpack.c.l.b16 %v260
    %v353 = vunpack.c.h.b16 %v260
    %v354 = vunpack.c.l.b16 %v261
    %v355 = vunpack.c.h.b16 %v261
    %v356 = vunpack.c.l.b16 %v262
    %v357 = vunpack.c.h.b16 %v262
    %v358 = vunpack.c.l.b16 %v263
    %v359 = vunpack.c.h.b16 %v263
    %v360 = vunpack.c.l.b16 %v264
    %v361 = vunpack.c.h.b16 %v264
    %v362 = vunpack.c.l.b16 %v265
    %v363 = vunpack.c.h.b16 %v265
    %v364 = vunpack.c.l.b16 %v266
    %v365 = vunpack.c.h.b16 %v266
    %v366 = vunpack.c.l.b16 %v267
    %v367 = vunpack.c.h.b16 %v267
    %v368 = vunpack.c.l.b16 %v268
    %v369 = vunpack.c.h.b16 %v268
    %v370 = vunpack.c.l.b16 %v269
    %v371 = vunpack.c.h.b16 %v269
    %v372 = vunpack.c.l.b16 %v270
    %v373 = vunpack.c.h.b16 %v270
    %v374 = vunpack.c.l.b16 %v271
    %v375 = vunpack.c.h.b16 %v271
    %v376 = vpack.c.b16 %v314, %v312
    %v377 = vpack.c.b16 %v315, %v313
    %v378 = vpack.c.b16 %v318, %v316
    %v379 = vpack.c.b16 %v319, %v317
    %v380 = vpack.c.b16 %v322, %v320
    %v381 = vpack.c.b16 %v323, %v321
    %v382 = vpack.c.b16 %v326, %v324
    %v383 = vpack.c.b16 %v327, %v325
    %v384 = vpack.c.b16 %v330, %v328
    %v385 = vpack.c.b16 %v331, %v329
    %v386 = vpack.c.b16 %v334, %v332
    %v387 = vpack.c.b16 %v335, %v333
    %v388 = vpack.c.b16 %v338, %v336
    %v389 = vpack.c.b16 %v339, %v337
    %v390 = vpack.c.b16 %v342, %v340
    %v391 = vpack.c.b16 %v343, %v341
    %v392 = vpack.c.b16 %v346, %v344
    %v393 = vpack.c.b16 %v347, %v345
    %v394 = vpack.c.b16 %v350, %v348
    %v395 = vpack.c.b16 %v351, %v349
    %v396 = vpack.c.b16 %v354, %v352
    %v397 = vpack.c.b16 %v355, %v353
    %v398 = vpack.c.b16 %v358, %v356
    %v399 = vpack.c.b16 %v359, %v357
    %v400 = vpack.c.b16 %v362, %v360
    %v401 = vpack.c.b16 %v363, %v361
    %v402 = vpack.c.b16 %v366, %v364
    %v403 = vpack.c.b16 %v367, %v365
    %v404 = vpack.c.b16 %v370, %v368
    %v405 = vpack.c.b16 %v371, %v369
    %v406 = vpack.c.b16 %v374, %v372
    %v407 = vpack.c.b16 %v375, %v373
    %440 = vmatprep.subr.bf16.mxu0 %v391
    %441 = vmatpush1.bf16.msra.mxu0 %v390
    %442 = vmatprep.subr.bf16.mxu0 %v389
    %443 = vmatpush1.bf16.msra.mxu0 %v388
    %444 = vmatprep.subr.bf16.mxu0 %v387
    %445 = vmatpush1.bf16.msra.mxu0 %v386
    %446 = vmatprep.subr.bf16.mxu0 %v385
    %447 = vmatpush1.bf16.msra.mxu0 %v384
    %448 = vmatprep.subr.bf16.mxu0 %v383
    %449 = vmatpush1.bf16.msra.mxu0 %v382
    %450 = vmatprep.subr.bf16.mxu0 %v381
    %451 = vmatpush1.bf16.msra.mxu0 %v380
    %452 = vmatprep.subr.bf16.mxu0 %v379
    %453 = vmatpush1.bf16.msra.mxu0 %v378
    %454 = vmatprep.subr.bf16.mxu0 %v377
    %455 = vmatpush1.bf16.msra.mxu0 %v376
    %456 = vmatprep.subr.bf16.mxu0 %v407
    %457 = vmatpush2.bf16.msra.mxu0 %v406
    %458 = vmatprep.subr.bf16.mxu0 %v405
    %459 = vmatpush2.bf16.msra.mxu0 %v404
    %460 = vmatprep.subr.bf16.mxu0 %v403
    %461 = vmatpush2.bf16.msra.mxu0 %v402
    %462 = vmatprep.subr.bf16.mxu0 %v401
    %463 = vmatpush2.bf16.msra.mxu0 %v400
    %464 = vmatprep.subr.bf16.mxu0 %v399
    %465 = vmatpush2.bf16.msra.mxu0 %v398
    %466 = vmatprep.subr.bf16.mxu0 %v397
    %467 = vmatpush2.bf16.msra.mxu0 %v396
    %468 = vmatprep.subr.bf16.mxu0 %v395
    %469 = vmatpush2.bf16.msra.mxu0 %v394
    %470 = vmatprep.subr.bf16.mxu0 %v393
    %471 = vmatpush2.bf16.msra.mxu0 %v392
    %472 = vmatprep.mubr.bf16.mxu0 %v239
    %473 = vmatmul.mubr.bf16.gmra.mxu0 %v238
    %v474 = vpop.f32.mrf.mxu0
    %v475 = vadd.f32 %v275, %v474
    %v476 = vpop.f32.mrf.mxu0
    %v477 = vadd.f32 %v279, %v476
    %v478 = vpop.f32.mrf.mxu0
    %v479 = vpop.f32.mrf.mxu0
    %480 = vdwg.mxu0
    %v481 = vadd.f32 %v475, %v477
    %482 = vadd.xlane.f32.xlu0 %v481
    %v483 = vpop.xlane.xlu0 %482
    %v484 = vmul.f32 %v483, %v202
    %v485 = vsub.f32 %v475, %v484
    %v486 = vsub.f32 %v477, %v484
    %v487 = vmul.f32 %v485, %v485
    %v488 = vmul.f32 %v486, %v486
    %v489 = vadd.f32 %v487, %v488
    %490 = vadd.xlane.f32.xlu0 %v489
    %v491 = vpop.xlane.xlu0 %490
    %v492 = vmul.f32 %v491, %v202
    %v493 = vadd.f32 %v492, 1e-05
    %v494 = vrsqrt.pop %v493
    %v495 = vmul.f32 %v485, %v494
    %v496 = vmul.f32 %v486, %v494
    %v497 = vlaneseq
    %v498 = vshrl.u32 %v497, 7
    %v499 = vsub.s32 5, %v498
    %v500 = vrot.slane %v63, %v499
    %v501 = vlaneseq
    %v502 = vshrl.u32 %v501, 7
    %v503 = vsub.s32 5, %v502
    %v504 = vrot.slane %v64, %v503
    %v505 = vmul.f32 %v495, %v500
    %v506 = vmul.f32 %v496, %v504
    %v507 = vlaneseq
    %v508 = vshrl.u32 %v507, 7
    %v509 = vsub.s32 6, %v508
    %v510 = vrot.slane %v63, %v509
    %v511 = vlaneseq
    %v512 = vshrl.u32 %v511, 7
    %v513 = vsub.s32 6, %v512
    %v514 = vrot.slane %v64, %v513
    %v515 = vadd.f32 %v505, %v510
    %v516 = vadd.f32 %v506, %v514
    %v517 = vmax.f32 %v515, 0.0
    %v518 = vmax.f32 %v516, 0.0
    %v519 = vmax.f32 %v197, 0.0
    %v520 = vmax.f32 %v198, 0.0
    %v521 = vpack.c.bf16 %v519, %v519
    %v522 = vpack.c.bf16 %v520, %v520
    %v523 = vld [vmem:[#allocation4] sm:$0xff]
    %v524 = vld [vmem:[#allocation4 + $0x8] sm:$0xff]
    %v525 = vld [vmem:[#allocation4 + $0x10] sm:$0xff]
    %v526 = vld [vmem:[#allocation4 + $0x18] sm:$0xff]
    %v527 = vld [vmem:[#allocation4 + $0x20] sm:$0xff]
    %v528 = vld [vmem:[#allocation4 + $0x28] sm:$0xff]
    %v529 = vld [vmem:[#allocation4 + $0x30] sm:$0xff]
    %v530 = vld [vmem:[#allocation4 + $0x38] sm:$0xff]
    %v531 = vld [vmem:[#allocation4 + $0x40] sm:$0xff]
    %v532 = vld [vmem:[#allocation4 + $0x48] sm:$0xff]
    %v533 = vld [vmem:[#allocation4 + $0x50] sm:$0xff]
    %v534 = vld [vmem:[#allocation4 + $0x58] sm:$0xff]
    %v535 = vld [vmem:[#allocation4 + $0x60] sm:$0xff]
    %v536 = vld [vmem:[#allocation4 + $0x68] sm:$0xff]
    %v537 = vld [vmem:[#allocation4 + $0x70] sm:$0xff]
    %v538 = vld [vmem:[#allocation4 + $0x78] sm:$0xff]
    %v539 = vld [vmem:[#allocation4 + $0x80] sm:$0xff]
    %v540 = vld [vmem:[#allocation4 + $0x88] sm:$0xff]
    %v541 = vld [vmem:[#allocation4 + $0x90] sm:$0xff]
    %v542 = vld [vmem:[#allocation4 + $0x98] sm:$0xff]
    %v543 = vld [vmem:[#allocation4 + $0xa0] sm:$0xff]
    %v544 = vld [vmem:[#allocation4 + $0xa8] sm:$0xff]
    %v545 = vld [vmem:[#allocation4 + $0xb0] sm:$0xff]
    %v546 = vld [vmem:[#allocation4 + $0xb8] sm:$0xff]
    %v547 = vld [vmem:[#allocation4 + $0xc0] sm:$0xff]
    %v548 = vld [vmem:[#allocation4 + $0xc8] sm:$0xff]
    %v549 = vld [vmem:[#allocation4 + $0xd0] sm:$0xff]
    %v550 = vld [vmem:[#allocation4 + $0xd8] sm:$0xff]
    %v551 = vld [vmem:[#allocation4 + $0xe0] sm:$0xff]
    %v552 = vld [vmem:[#allocation4 + $0xe8] sm:$0xff]
    %v553 = vld [vmem:[#allocation4 + $0xf0] sm:$0xff]
    %v554 = vld [vmem:[#allocation4 + $0xf8] sm:$0xff]
    %v555 = vlaneseq
    %v556 = vshrl.u32 %v555, 7
    %v557 = vsub.s32 7, %v556
    %v558 = vrot.slane %v63, %v557
    %v559 = vlaneseq
    %v560 = vshrl.u32 %v559, 7
    %v561 = vsub.s32 7, %v560
    %v562 = vrot.slane %v64, %v561
    %v595 = vunpack.c.l.b16 %v523
    %v596 = vunpack.c.h.b16 %v523
    %v597 = vunpack.c.l.b16 %v524
    %v598 = vunpack.c.h.b16 %v524
    %v599 = vunpack.c.l.b16 %v525
    %v600 = vunpack.c.h.b16 %v525
    %v601 = vunpack.c.l.b16 %v526
    %v602 = vunpack.c.h.b16 %v526
    %v603 = vunpack.c.l.b16 %v527
    %v604 = vunpack.c.h.b16 %v527
    %v605 = vunpack.c.l.b16 %v528
    %v606 = vunpack.c.h.b16 %v528
    %v607 = vunpack.c.l.b16 %v529
    %v608 = vunpack.c.h.b16 %v529
    %v609 = vunpack.c.l.b16 %v530
    %v610 = vunpack.c.h.b16 %v530
    %v611 = vunpack.c.l.b16 %v531
    %v612 = vunpack.c.h.b16 %v531
    %v613 = vunpack.c.l.b16 %v532
    %v614 = vunpack.c.h.b16 %v532
    %v615 = vunpack.c.l.b16 %v533
    %v616 = vunpack.c.h.b16 %v533
    %v617 = vunpack.c.l.b16 %v534
    %v618 = vunpack.c.h.b16 %v534
    %v619 = vunpack.c.l.b16 %v535
    %v620 = vunpack.c.h.b16 %v535
    %v621 = vunpack.c.l.b16 %v536
    %v622 = vunpack.c.h.b16 %v536
    %v623 = vunpack.c.l.b16 %v537
    %v624 = vunpack.c.h.b16 %v537
    %v625 = vunpack.c.l.b16 %v538
    %v626 = vunpack.c.h.b16 %v538
    %v627 = vunpack.c.l.b16 %v539
    %v628 = vunpack.c.h.b16 %v539
    %v629 = vunpack.c.l.b16 %v540
    %v630 = vunpack.c.h.b16 %v540
    %v631 = vunpack.c.l.b16 %v541
    %v632 = vunpack.c.h.b16 %v541
    %v633 = vunpack.c.l.b16 %v542
    %v634 = vunpack.c.h.b16 %v542
    %v635 = vunpack.c.l.b16 %v543
    %v636 = vunpack.c.h.b16 %v543
    %v637 = vunpack.c.l.b16 %v544
    %v638 = vunpack.c.h.b16 %v544
    %v639 = vunpack.c.l.b16 %v545
    %v640 = vunpack.c.h.b16 %v545
    %v641 = vunpack.c.l.b16 %v546
    %v642 = vunpack.c.h.b16 %v546
    %v643 = vunpack.c.l.b16 %v547
    %v644 = vunpack.c.h.b16 %v547
    %v645 = vunpack.c.l.b16 %v548
    %v646 = vunpack.c.h.b16 %v548
    %v647 = vunpack.c.l.b16 %v549
    %v648 = vunpack.c.h.b16 %v549
    %v649 = vunpack.c.l.b16 %v550
    %v650 = vunpack.c.h.b16 %v550
    %v651 = vunpack.c.l.b16 %v551
    %v652 = vunpack.c.h.b16 %v551
    %v653 = vunpack.c.l.b16 %v552
    %v654 = vunpack.c.h.b16 %v552
    %v655 = vunpack.c.l.b16 %v553
    %v656 = vunpack.c.h.b16 %v553
    %v657 = vunpack.c.l.b16 %v554
    %v658 = vunpack.c.h.b16 %v554
    %v659 = vpack.c.b16 %v597, %v595
    %v660 = vpack.c.b16 %v598, %v596
    %v661 = vpack.c.b16 %v601, %v599
    %v662 = vpack.c.b16 %v602, %v600
    %v663 = vpack.c.b16 %v605, %v603
    %v664 = vpack.c.b16 %v606, %v604
    %v665 = vpack.c.b16 %v609, %v607
    %v666 = vpack.c.b16 %v610, %v608
    %v667 = vpack.c.b16 %v613, %v611
    %v668 = vpack.c.b16 %v614, %v612
    %v669 = vpack.c.b16 %v617, %v615
    %v670 = vpack.c.b16 %v618, %v616
    %v671 = vpack.c.b16 %v621, %v619
    %v672 = vpack.c.b16 %v622, %v620
    %v673 = vpack.c.b16 %v625, %v623
    %v674 = vpack.c.b16 %v626, %v624
    %v675 = vpack.c.b16 %v629, %v627
    %v676 = vpack.c.b16 %v630, %v628
    %v677 = vpack.c.b16 %v633, %v631
    %v678 = vpack.c.b16 %v634, %v632
    %v679 = vpack.c.b16 %v637, %v635
    %v680 = vpack.c.b16 %v638, %v636
    %v681 = vpack.c.b16 %v641, %v639
    %v682 = vpack.c.b16 %v642, %v640
    %v683 = vpack.c.b16 %v645, %v643
    %v684 = vpack.c.b16 %v646, %v644
    %v685 = vpack.c.b16 %v649, %v647
    %v686 = vpack.c.b16 %v650, %v648
    %v687 = vpack.c.b16 %v653, %v651
    %v688 = vpack.c.b16 %v654, %v652
    %v689 = vpack.c.b16 %v657, %v655
    %v690 = vpack.c.b16 %v658, %v656
    %723 = vmatprep.subr.bf16.mxu0 %v674
    %724 = vmatpush1.bf16.msra.mxu0 %v673
    %725 = vmatprep.subr.bf16.mxu0 %v672
    %726 = vmatpush1.bf16.msra.mxu0 %v671
    %727 = vmatprep.subr.bf16.mxu0 %v670
    %728 = vmatpush1.bf16.msra.mxu0 %v669
    %729 = vmatprep.subr.bf16.mxu0 %v668
    %730 = vmatpush1.bf16.msra.mxu0 %v667
    %731 = vmatprep.subr.bf16.mxu0 %v666
    %732 = vmatpush1.bf16.msra.mxu0 %v665
    %733 = vmatprep.subr.bf16.mxu0 %v664
    %734 = vmatpush1.bf16.msra.mxu0 %v663
    %735 = vmatprep.subr.bf16.mxu0 %v662
    %736 = vmatpush1.bf16.msra.mxu0 %v661
    %737 = vmatprep.subr.bf16.mxu0 %v660
    %738 = vmatpush1.bf16.msra.mxu0 %v659
    %739 = vmatprep.subr.bf16.mxu0 %v690
    %740 = vmatpush2.bf16.msra.mxu0 %v689
    %741 = vmatprep.subr.bf16.mxu0 %v688
    %742 = vmatpush2.bf16.msra.mxu0 %v687
    %743 = vmatprep.subr.bf16.mxu0 %v686
    %744 = vmatpush2.bf16.msra.mxu0 %v685
    %745 = vmatprep.subr.bf16.mxu0 %v684
    %746 = vmatpush2.bf16.msra.mxu0 %v683
    %747 = vmatprep.subr.bf16.mxu0 %v682
    %748 = vmatpush2.bf16.msra.mxu0 %v681
    %749 = vmatprep.subr.bf16.mxu0 %v680
    %750 = vmatpush2.bf16.msra.mxu0 %v679
    %751 = vmatprep.subr.bf16.mxu0 %v678
    %752 = vmatpush2.bf16.msra.mxu0 %v677
    %753 = vmatprep.subr.bf16.mxu0 %v676
    %754 = vmatpush2.bf16.msra.mxu0 %v675
    %755 = vmatprep.mubr.bf16.mxu0 %v522
    %756 = vmatmul.mubr.bf16.gmra.mxu0 %v521
    %v757 = vpop.f32.mrf.mxu0
    %v758 = vadd.f32 %v558, %v757
    %v759 = vpop.f32.mrf.mxu0
    %v760 = vadd.f32 %v562, %v759
    %v761 = vpop.f32.mrf.mxu0
    %v762 = vpop.f32.mrf.mxu0
    %763 = vdwg.mxu0
    %v764 = vmax.f32 %v758, 0.0
    %v765 = vmax.f32 %v760, 0.0
    %v766 = vpack.c.bf16 %v517, %v517
    %v767 = vpack.c.bf16 %v518, %v518
    %v768 = vld [vmem:[%s4] sm:$0xf]
    %v769 = vld [vmem:[%s4 + $0x4] sm:$0xf]
    %v770 = vld [vmem:[%s4 + $0x8] sm:$0xf]
    %v771 = vld [vmem:[%s4 + $0xc] sm:$0xf]
    %v772 = vld [vmem:[%s4 + $0x10] sm:$0xf]
    %v773 = vld [vmem:[%s4 + $0x14] sm:$0xf]
    %v774 = vld [vmem:[%s4 + $0x18] sm:$0xf]
    %v775 = vld [vmem:[%s4 + $0x1c] sm:$0xf]
    %v776 = vld [vmem:[%s4 + $0x20] sm:$0xf]
    %v777 = vld [vmem:[%s4 + $0x24] sm:$0xf]
    %v778 = vld [vmem:[%s4 + $0x28] sm:$0xf]
    %v779 = vld [vmem:[%s4 + $0x2c] sm:$0xf]
    %v780 = vld [vmem:[%s4 + $0x30] sm:$0xf]
    %v781 = vld [vmem:[%s4 + $0x34] sm:$0xf]
    %v782 = vld [vmem:[%s4 + $0x38] sm:$0xf]
    %v783 = vld [vmem:[%s4 + $0x3c] sm:$0xf]
    %v784 = vld [vmem:[%s4 + $0x40] sm:$0xf]
    %v785 = vld [vmem:[%s4 + $0x44] sm:$0xf]
    %v786 = vld [vmem:[%s4 + $0x48] sm:$0xf]
    %v787 = vld [vmem:[%s4 + $0x4c] sm:$0xf]
    %v788 = vld [vmem:[%s4 + $0x50] sm:$0xf]
    %v789 = vld [vmem:[%s4 + $0x54] sm:$0xf]
    %v790 = vld [vmem:[%s4 + $0x58] sm:$0xf]
    %v791 = vld [vmem:[%s4 + $0x5c] sm:$0xf]
    %v792 = vld [vmem:[%s4 + $0x60] sm:$0xf]
    %v793 = vld [vmem:[%s4 + $0x64] sm:$0xf]
    %v794 = vld [vmem:[%s4 + $0x68] sm:$0xf]
    %v795 = vld [vmem:[%s4 + $0x6c] sm:$0xf]
    %v796 = vld [vmem:[%s4 + $0x70] sm:$0xf]
    %v797 = vld [vmem:[%s4 + $0x74] sm:$0xf]
    %v798 = vld [vmem:[%s4 + $0x78] sm:$0xf]
    %v799 = vld [vmem:[%s4 + $0x7c] sm:$0xf]
    %v800 = vpack.c.bf16 %v764, %v764
    %v801 = vpack.c.bf16 %v765, %v765
    %v802 = vld [vmem:[%s4 + $0x80] sm:$0xf]
    %v803 = vld [vmem:[%s4 + $0x84] sm:$0xf]
    %v804 = vld [vmem:[%s4 + $0x88] sm:$0xf]
    %v805 = vld [vmem:[%s4 + $0x8c] sm:$0xf]
    %v806 = vld [vmem:[%s4 + $0x90] sm:$0xf]
    %v807 = vld [vmem:[%s4 + $0x94] sm:$0xf]
    %v808 = vld [vmem:[%s4 + $0x98] sm:$0xf]
    %v809 = vld [vmem:[%s4 + $0x9c] sm:$0xf]
    %v810 = vld [vmem:[%s4 + $0xa0] sm:$0xf]
    %v811 = vld [vmem:[%s4 + $0xa4] sm:$0xf]
    %v812 = vld [vmem:[%s4 + $0xa8] sm:$0xf]
    %v813 = vld [vmem:[%s4 + $0xac] sm:$0xf]
    %v814 = vld [vmem:[%s4 + $0xb0] sm:$0xf]
    %v815 = vld [vmem:[%s4 + $0xb4] sm:$0xf]
    %v816 = vld [vmem:[%s4 + $0xb8] sm:$0xf]
    %v817 = vld [vmem:[%s4 + $0xbc] sm:$0xf]
    %v818 = vld [vmem:[%s4 + $0xc0] sm:$0xf]
    %v819 = vld [vmem:[%s4 + $0xc4] sm:$0xf]
    %v820 = vld [vmem:[%s4 + $0xc8] sm:$0xf]
    %v821 = vld [vmem:[%s4 + $0xcc] sm:$0xf]
    %v822 = vld [vmem:[%s4 + $0xd0] sm:$0xf]
    %v823 = vld [vmem:[%s4 + $0xd4] sm:$0xf]
    %v824 = vld [vmem:[%s4 + $0xd8] sm:$0xf]
    %v825 = vld [vmem:[%s4 + $0xdc] sm:$0xf]
    %v826 = vld [vmem:[%s4 + $0xe0] sm:$0xf]
    %v827 = vld [vmem:[%s4 + $0xe4] sm:$0xf]
    %v828 = vld [vmem:[%s4 + $0xe8] sm:$0xf]
    %v829 = vld [vmem:[%s4 + $0xec] sm:$0xf]
    %v830 = vld [vmem:[%s4 + $0xf0] sm:$0xf]
    %v831 = vld [vmem:[%s4 + $0xf4] sm:$0xf]
    %v832 = vld [vmem:[%s4 + $0xf8] sm:$0xf]
    %v833 = vld [vmem:[%s4 + $0xfc] sm:$0xf]
    %v866 = vunpack.c.l.b16 %v802
    %v867 = vunpack.c.l.b16 %v803
    %v868 = vunpack.c.l.b16 %v804
    %v869 = vunpack.c.l.b16 %v805
    %v870 = vunpack.c.l.b16 %v806
    %v871 = vunpack.c.l.b16 %v807
    %v872 = vunpack.c.l.b16 %v808
    %v873 = vunpack.c.l.b16 %v809
    %v874 = vunpack.c.l.b16 %v810
    %v875 = vunpack.c.l.b16 %v811
    %v876 = vunpack.c.l.b16 %v812
    %v877 = vunpack.c.l.b16 %v813
    %v878 = vunpack.c.l.b16 %v814
    %v879 = vunpack.c.l.b16 %v815
    %v880 = vunpack.c.l.b16 %v816
    %v881 = vunpack.c.l.b16 %v817
    %v882 = vunpack.c.l.b16 %v818
    %v883 = vunpack.c.l.b16 %v819
    %v884 = vunpack.c.l.b16 %v820
    %v885 = vunpack.c.l.b16 %v821
    %v886 = vunpack.c.l.b16 %v822
    %v887 = vunpack.c.l.b16 %v823
    %v888 = vunpack.c.l.b16 %v824
    %v889 = vunpack.c.l.b16 %v825
    %v890 = vunpack.c.l.b16 %v826
    %v891 = vunpack.c.l.b16 %v827
    %v892 = vunpack.c.l.b16 %v828
    %v893 = vunpack.c.l.b16 %v829
    %v894 = vunpack.c.l.b16 %v830
    %v895 = vunpack.c.l.b16 %v831
    %v896 = vunpack.c.l.b16 %v832
    %v897 = vunpack.c.l.b16 %v833
    %v898 = vpack.c.b16 %v867, %v866
    %v899 = vpack.c.b16 %v869, %v868
    %v900 = vpack.c.b16 %v871, %v870
    %v901 = vpack.c.b16 %v873, %v872
    %v902 = vpack.c.b16 %v875, %v874
    %v903 = vpack.c.b16 %v877, %v876
    %v904 = vpack.c.b16 %v879, %v878
    %v905 = vpack.c.b16 %v881, %v880
    %v906 = vpack.c.b16 %v883, %v882
    %v907 = vpack.c.b16 %v885, %v884
    %v908 = vpack.c.b16 %v887, %v886
    %v909 = vpack.c.b16 %v889, %v888
    %v910 = vpack.c.b16 %v891, %v890
    %v911 = vpack.c.b16 %v893, %v892
    %v912 = vpack.c.b16 %v895, %v894
    %v913 = vpack.c.b16 %v897, %v896
    %930 = vmatprep.subr.bf16.mxu0 0
    %931 = vmatpush1.bf16.msra.mxu0 %v905
    %932 = vmatprep.subr.bf16.mxu0 0
    %933 = vmatpush1.bf16.msra.mxu0 %v904
    %934 = vmatprep.subr.bf16.mxu0 0
    %935 = vmatpush1.bf16.msra.mxu0 %v903
    %936 = vmatprep.subr.bf16.mxu0 0
    %937 = vmatpush1.bf16.msra.mxu0 %v902
    %938 = vmatprep.subr.bf16.mxu0 0
    %939 = vmatpush1.bf16.msra.mxu0 %v901
    %940 = vmatprep.subr.bf16.mxu0 0
    %941 = vmatpush1.bf16.msra.mxu0 %v900
    %942 = vmatprep.subr.bf16.mxu0 0
    %943 = vmatpush1.bf16.msra.mxu0 %v899
    %944 = vmatprep.subr.bf16.mxu0 0
    %945 = vmatpush1.bf16.msra.mxu0 %v898
    %946 = vmatprep.subr.bf16.mxu0 0
    %947 = vmatpush2.bf16.msra.mxu0 %v913
    %948 = vmatprep.subr.bf16.mxu0 0
    %949 = vmatpush2.bf16.msra.mxu0 %v912
    %950 = vmatprep.subr.bf16.mxu0 0
    %951 = vmatpush2.bf16.msra.mxu0 %v911
    %952 = vmatprep.subr.bf16.mxu0 0
    %953 = vmatpush2.bf16.msra.mxu0 %v910
    %954 = vmatprep.subr.bf16.mxu0 0
    %955 = vmatpush2.bf16.msra.mxu0 %v909
    %956 = vmatprep.subr.bf16.mxu0 0
    %957 = vmatpush2.bf16.msra.mxu0 %v908
    %958 = vmatprep.subr.bf16.mxu0 0
    %959 = vmatpush2.bf16.msra.mxu0 %v907
    %960 = vmatprep.subr.bf16.mxu0 0
    %961 = vmatpush2.bf16.msra.mxu0 %v906
    %962 = vmatprep.mubr.bf16.mxu0 %v801
    %963 = vmatmul.mubr.bf16.gmra.mxu0 %v800
    %v964 = vpop.f32.mrf.mxu0
    %v965 = vadd.f32 0.0, %v964
    %v966 = vpop.f32.mrf.mxu0
    %v967 = vpop.f32.mrf.mxu0
    %v968 = vpop.f32.mrf.mxu0
    %969 = vdwg.mxu0
    %v1002 = vunpack.c.l.b16 %v768
    %v1003 = vunpack.c.l.b16 %v769
    %v1004 = vunpack.c.l.b16 %v770
    %v1005 = vunpack.c.l.b16 %v771
    %v1006 = vunpack.c.l.b16 %v772
    %v1007 = vunpack.c.l.b16 %v773
    %v1008 = vunpack.c.l.b16 %v774
    %v1009 = vunpack.c.l.b16 %v775
    %v1010 = vunpack.c.l.b16 %v776
    %v1011 = vunpack.c.l.b16 %v777
    %v1012 = vunpack.c.l.b16 %v778
    %v1013 = vunpack.c.l.b16 %v779
    %v1014 = vunpack.c.l.b16 %v780
    %v1015 = vunpack.c.l.b16 %v781
    %v1016 = vunpack.c.l.b16 %v782
    %v1017 = vunpack.c.l.b16 %v783
    %v1018 = vunpack.c.l.b16 %v784
    %v1019 = vunpack.c.l.b16 %v785
    %v1020 = vunpack.c.l.b16 %v786
    %v1021 = vunpack.c.l.b16 %v787
    %v1022 = vunpack.c.l.b16 %v788
    %v1023 = vunpack.c.l.b16 %v789
    %v1024 = vunpack.c.l.b16 %v790
    %v1025 = vunpack.c.l.b16 %v791
    %v1026 = vunpack.c.l.b16 %v792
    %v1027 = vunpack.c.l.b16 %v793
    %v1028 = vunpack.c.l.b16 %v794
    %v1029 = vunpack.c.l.b16 %v795
    %v1030 = vunpack.c.l.b16 %v796
    %v1031 = vunpack.c.l.b16 %v797
    %v1032 = vunpack.c.l.b16 %v798
    %v1033 = vunpack.c.l.b16 %v799
    %v1034 = vpack.c.b16 %v1003, %v1002
    %v1035 = vpack.c.b16 %v1005, %v1004
    %v1036 = vpack.c.b16 %v1007, %v1006
    %v1037 = vpack.c.b16 %v1009, %v1008
    %v1038 = vpack.c.b16 %v1011, %v1010
    %v1039 = vpack.c.b16 %v1013, %v1012
    %v1040 = vpack.c.b16 %v1015, %v1014
    %v1041 = vpack.c.b16 %v1017, %v1016
    %v1042 = vpack.c.b16 %v1019, %v1018
    %v1043 = vpack.c.b16 %v1021, %v1020
    %v1044 = vpack.c.b16 %v1023, %v1022
    %v1045 = vpack.c.b16 %v1025, %v1024
    %v1046 = vpack.c.b16 %v1027, %v1026
    %v1047 = vpack.c.b16 %v1029, %v1028
    %v1048 = vpack.c.b16 %v1031, %v1030
    %v1049 = vpack.c.b16 %v1033, %v1032
    %1066 = vmatprep.subr.bf16.mxu0 0
    %1067 = vmatpush1.bf16.msra.mxu0 %v1041
    %1068 = vmatprep.subr.bf16.mxu0 0
    %1069 = vmatpush1.bf16.msra.mxu0 %v1040
    %1070 = vmatprep.subr.bf16.mxu0 0
    %1071 = vmatpush1.bf16.msra.mxu0 %v1039
    %1072 = vmatprep.subr.bf16.mxu0 0
    %1073 = vmatpush1.bf16.msra.mxu0 %v1038
    %1074 = vmatprep.subr.bf16.mxu0 0
    %1075 = vmatpush1.bf16.msra.mxu0 %v1037
    %1076 = vmatprep.subr.bf16.mxu0 0
    %1077 = vmatpush1.bf16.msra.mxu0 %v1036
    %1078 = vmatprep.subr.bf16.mxu0 0
    %1079 = vmatpush1.bf16.msra.mxu0 %v1035
    %1080 = vmatprep.subr.bf16.mxu0 0
    %1081 = vmatpush1.bf16.msra.mxu0 %v1034
    %1082 = vmatprep.subr.bf16.mxu0 0
    %1083 = vmatpush2.bf16.msra.mxu0 %v1049
    %1084 = vmatprep.subr.bf16.mxu0 0
    %1085 = vmatpush2.bf16.msra.mxu0 %v1048
    %1086 = vmatprep.subr.bf16.mxu0 0
    %1087 = vmatpush2.bf16.msra.mxu0 %v1047
    %1088 = vmatprep.subr.bf16.mxu0 0
    %1089 = vmatpush2.bf16.msra.mxu0 %v1046
    %1090 = vmatprep.subr.bf16.mxu0 0
    %1091 = vmatpush2.bf16.msra.mxu0 %v1045
    %1092 = vmatprep.subr.bf16.mxu0 0
    %1093 = vmatpush2.bf16.msra.mxu0 %v1044
    %1094 = vmatprep.subr.bf16.mxu0 0
    %1095 = vmatpush2.bf16.msra.mxu0 %v1043
    %1096 = vmatprep.subr.bf16.mxu0 0
    %1097 = vmatpush2.bf16.msra.mxu0 %v1042
    %1098 = vmatprep.mubr.bf16.mxu0 %v767
    %1099 = vmatmul.mubr.bf16.gmra.mxu0 %v766
    %v1100 = vpop.f32.mrf.mxu0
    %v1101 = vadd.f32 %v965, %v1100
    %v1102 = vpop.f32.mrf.mxu0
    %v1103 = vpop.f32.mrf.mxu0
    %v1104 = vpop.f32.mrf.mxu0
    %1105 = vdwg.mxu0
    %v1106 = vlaneseq
    %v1107 = vshrl.u32 %v1106, 7
    %v1108 = vsub.s32 0, %v1107
    %v1109 = vrot.slane %v65, %v1108
    %v1110 = vadd.f32 %v1101, %v1109
    %v1111 = vlaneseq
    %v1112 = vand.u32 %v1111, 127
    %vm1113 = vcmp.lt.s32.totalorder %v1112, 2
    %v1114 = vtanh.pop %v1110
    %v1115 = vsel %vm1113, %v1114, %v1110
    %1116 = vst.msk [vmem:[%s6] sm:$0xff] %vm80, %v1115
    // Predicated region
    $region38: #{actor_critic_forward.1} parent=1 // pred_check
      _
    $region39: #{actor_critic_forward.1} parent=1 // pred_check_branch
      %1118 = sbr.rel (0) target = $region41
    $region40: #{actor_critic_forward.1} parent=1 // pred_region
      _
    $region41: #{actor_critic_forward.1} parent=1 // pred_fallthru
      _
    // Predicated region
    $region42: #{actor_critic_forward.1} parent=1 // pred_check
      _
    $region43: #{actor_critic_forward.1} parent=1 // pred_check_branch
      %1120 = sbr.rel (0) target = $region45
    $region44: #{actor_critic_forward.1} parent=1 // pred_region
      _
    $region45: #{actor_critic_forward.1} parent=1 // pred_fallthru
      _
    %1121 = vsyncpa [#allocation3], 1
    %1122 = vsyncpa [#allocation5], 1

</llo_original>
